<compile_context>
chip_gen: v5e
topology: v5e:2x2
jax: 0.10.0
libtpu: 0.0.40
codegen_flags: <defaults>
</compile_context>

<pallas_src>
import jax
import jax.numpy as jnp
import numpy as np
from jax.experimental import pallas as pl
from jax.experimental.pallas import tpu as pltpu


# ~4 MiB per block: with in+out (and the extra input block on the streaming
# path) double-buffered this stays well under the scoped-VMEM defaults of all
# generations (16 MiB v5e / 32 MiB v6e,v7x) and far under v7x's 64 MiB physical
# VMEM, while being large enough that the ~0.35 us per-grid-step overhead is
# negligible at HBM roofline.
_BLOCK_BYTES_TARGET = 4 * 1024 * 1024
_VMEM_LIMIT_CAP = 64 * 1024 * 1024


def _divisors(n: int):
    out = []
    i = 1
    while i * i <= n:
        if n % i == 0:
            out.append(i)
            if i != n // i:
                out.append(n // i)
        i += 1
    return sorted(out)


def _pick_batch_tile(N: int, row_bytes: int, block_bytes: int) -> int:
    """Largest multiple-of-8 divisor of N whose rows fit the block budget.

    Falls back to N itself when the sublane rule forces it (N < 8 or
    N % 8 != 0).  Prefers leaving >= 2 grid steps so v7x's two TensorCores
    both get work.
    """
    if N < 8 or N % 8 != 0:
        return N
    cands = [d for d in _divisors(N) if d % 8 == 0]
    max_rows = max(8, block_bytes // max(row_bytes, 1))
    fitting = [d for d in cands if d <= max_rows]
    n_tile = max(fitting) if fitting else min(cands)
    if N // n_tile == 1:                       # keep the megacore busy
        halves = [d for d in cands if d <= N // 2]
        if halves:
            n_tile = max(halves)
    return n_tile


def _pick_tiles_2d(N: int, T: int, itemsize: int, block_bytes: int):
    """(rows, time) tile for the streaming path: rows % 8 == 0 (or rows == N),
    time % 128 == 0, both dividing their axes, block as large as the budget
    allows (bias toward a wide, lane-dense time tile)."""
    if N < 8 or N % 8 != 0:
        row_cands = [N]
    else:
        row_cands = [d for d in _divisors(N) if d % 8 == 0]
    time_cands = [d for d in _divisors(T) if d % 128 == 0]
    best = None
    for nt in row_cands:
        for tt in time_cands:
            b = nt * tt * itemsize
            if b <= block_bytes:
                key = (b, tt)
                if best is None or key > best[0]:
                    best = (key, nt, tt)
    if best is None:
        return min(row_cands), min(time_cands)
    return best[1], best[2]


def _vmem_limit(n_blocks: int, block_bytes: int) -> int:
    # double-buffered blocks + slack for compiler scratch.
    need = 2 * n_blocks * block_bytes + (2 << 20)
    return int(min(max(need, 8 << 20), _VMEM_LIMIT_CAP))


def _shift_full_rows(x2d, s: int, itemsize: int, block_bytes: int):
    """Whole time axis resident per block; one pltpu.roll per block."""
    N, T = x2d.shape
    n_tile = _pick_batch_tile(N, T * itemsize, block_bytes)
    lane_aligned = (T % 128 == 0)

    def kernel(x_ref, o_ref):
        xv = x_ref[...]
        if lane_aligned:
            # XLU lane rotate: co-issues with the DMA load/store slots.
            o_ref[...] = pltpu.roll(xv, shift=s, axis=1)
        else:
            # TODO(synk): pad T to a lane multiple in the wrapper so this path
            # also becomes an XLU roll with a lane-dense store; the concatenate
            # fallback is correct but costs VALU/select work.
            o_ref[...] = jnp.concatenate([xv[:, T - s:], xv[:, :T - s]], axis=-1)

    blk = n_tile * T * itemsize
    return pl.pallas_call(
        kernel,
        out_shape=jax.ShapeDtypeStruct((N, T), x2d.dtype),
        grid=(N // n_tile,),
        in_specs=[pl.BlockSpec((n_tile, T), lambda i: (i, 0))],
        out_specs=pl.BlockSpec((n_tile, T), lambda i: (i, 0)),
        compiler_params=pltpu.CompilerParams(
            dimension_semantics=("parallel",),
            vmem_limit_bytes=_vmem_limit(2, blk),
        ),
    )(x2d)


def _shift_time_tiled(x2d, s: int, itemsize: int, block_bytes: int):
    """Streaming path for long signals: fixed VMEM footprint for any T.

    Decompose s = q*Tt + r.  Output block (i, j) is input block (i, (j-q)%nT)
    rotated by r, with the r wrapped columns coming from input block
    (i, (j-q-1)%nT).  The coarse rotation by q blocks is free (DMA addressing
    through the input index_map); the residual r is one select plus one XLU
    lane-rotate per block.
    """
    N, T = x2d.shape
    n_tile, t_tile = _pick_tiles_2d(N, T, itemsize, block_bytes)
    nT = T // t_tile
    q, r = divmod(s, t_tile)
    grid = (N // n_tile, nT)
    blk = n_tile * t_tile * itemsize

    out_spec = pl.BlockSpec((n_tile, t_tile), lambda i, j: (i, j))

    if r == 0:
        # Pure block-level rotation: identity kernel body, all movement in DMA.
        def kernel(b_ref, o_ref):
            o_ref[...] = b_ref[...]

        in_specs = [pl.BlockSpec((n_tile, t_tile),
                                 lambda i, j: (i, (j + nT - q) % nT))]
        operands = (x2d,)
        n_blocks = 2
    else:
        def kernel(a_ref, b_ref, o_ref):
            a = a_ref[...]                       # input block (j - q - 1) % nT
            b = b_ref[...]                       # input block (j - q)     % nT
            col = jax.lax.broadcasted_iota(jnp.int32, a.shape, dimension=1)
            stitched = jnp.where(col >= t_tile - r, a, b)   # VALU select
            o_ref[...] = pltpu.roll(stitched, shift=r, axis=1)  # XLU rotate

        in_specs = [
            pl.BlockSpec((n_tile, t_tile),
                         lambda i, j: (i, (j + 2 * nT - q - 1) % nT)),
            pl.BlockSpec((n_tile, t_tile),
                         lambda i, j: (i, (j + nT - q) % nT)),
        ]
        operands = (x2d, x2d)
        n_blocks = 3

    return pl.pallas_call(
        kernel,
        out_shape=jax.ShapeDtypeStruct((N, T), x2d.dtype),
        grid=grid,
        in_specs=in_specs,
        out_specs=out_spec,
        compiler_params=pltpu.CompilerParams(
            # Every (i, j) writes its own output block exactly once -> both
            # axes are independent and may be sharded across TensorCores.
            dimension_semantics=("parallel", "parallel"),
            vmem_limit_bytes=_vmem_limit(n_blocks, blk),
        ),
    )(*operands)


def shifter_forward(x, *, sec: float, sample_rate: int = 44100,
                    block_bytes: int = _BLOCK_BYTES_TARGET):
    """Equivalent of torch.roll(x, int(sec * sample_rate), dims=-1)."""
    shift = int(sec * sample_rate)
    orig_shape = x.shape
    T = orig_shape[-1]
    N = int(np.prod(orig_shape[:-1])) if x.ndim > 1 else 1
    s = shift % T                                # Python mod: non-negative
    if s == 0:
        return x                                 # identity permutation

    itemsize = int(np.dtype(x.dtype).itemsize)
    x2d = x.reshape(N, T)

    min_rows = 8 if (N >= 8 and N % 8 == 0) else N
    fits_full_row = min_rows * T * itemsize <= block_bytes
    if fits_full_row or T % 128 != 0:
        y2d = _shift_full_rows(x2d, s, itemsize, block_bytes)
    else:
        y2d = _shift_time_tiled(x2d, s, itemsize, block_bytes)
    return y2d.reshape(orig_shape)


def _reference_shift(x_np, sec, sample_rate):
    return np.roll(x_np, int(sec * sample_rate), axis=-1)


if __name__ == "__main__":
    SAMPLE_RATE = 44100
    key = jax.random.PRNGKey(0)
    k1, k2 = jax.random.split(key)

    # Case 1: small waveform (batch=2, channels=4, time=256), full-row path.
    #         sec=0.001 -> shift = 44 samples.
    x1 = jax.random.uniform(k1, (2, 4, 256), dtype=jnp.float32,
                            minval=-1.0, maxval=1.0)
    y1 = jax.block_until_ready(
        shifter_forward(x1, sec=0.001, sample_rate=SAMPLE_RATE))
    np.testing.assert_array_equal(
        np.asarray(y1), _reference_shift(np.asarray(x1), 0.001, SAMPLE_RATE))

    # Case 2: negative sec (shift = -88 samples), same path.
    y2 = jax.block_until_ready(
        shifter_forward(x1, sec=-0.002, sample_rate=SAMPLE_RATE))
    np.testing.assert_array_equal(
        np.asarray(y2), _reference_shift(np.asarray(x1), -0.002, SAMPLE_RATE))

    # Case 3: force the streaming time-tiled path with a tiny block budget
    #         (shift = 441 -> coarse q=1 block, residual r=185 with Tt=256;
    #          grid = (2, 4), both axes parallel).
    x3 = jax.random.uniform(k2, (16, 1024), dtype=jnp.float32,
                            minval=-1.0, maxval=1.0)
    y3 = jax.block_until_ready(
        shifter_forward(x3, sec=0.01, sample_rate=SAMPLE_RATE,
                        block_bytes=8 * 1024))
    np.testing.assert_array_equal(
        np.asarray(y3), _reference_shift(np.asarray(x3), 0.01, SAMPLE_RATE))

    print("KERNEL_OK")
</pallas_src>

<mosaic_0001>
module attributes {stable_mosaic.version = 11 : i64} {
  func.func @kernel(%arg0: i32, %arg1: memref<8x256xf32, #tpu.memory_space<vmem>>, %arg2: memref<8x256xf32, #tpu.memory_space<vmem>>) attributes {dimension_semantics = [#tpu.dimension_semantics<parallel>], iteration_bounds = array<i64: 1>, scalar_prefetch = 0 : i64, scratch_operands = 0 : i64, tpu.core_type = #tpu.core_type<tc>, window_params = [{transform_indices = @transform_0, window_bounds = array<i64: 8, 256>}, {transform_indices = @transform_1, window_bounds = array<i64: 8, 256>}]} {
    %c0 = arith.constant 0 : index
    %c0_0 = arith.constant 0 : index
    %0 = vector.load %arg1[%c0, %c0_0] : memref<8x256xf32, #tpu.memory_space<vmem>>, vector<8x256xf32>
    %c44_i32 = arith.constant 44 : i32
    %1 = tpu.dynamic_rotate %0 by %c44_i32 dim 1 : vector<8x256xf32>, i32 -> vector<8x256xf32>
    %c0_1 = arith.constant 0 : index
    %c0_2 = arith.constant 0 : index
    %2 = vector.load %arg2[%c0_1, %c0_2] : memref<8x256xf32, #tpu.memory_space<vmem>>, vector<8x256xf32>
    tpu.vector_store %arg2[%c0_1, %c0_2], %1 {strides = array<i32>} : memref<8x256xf32, #tpu.memory_space<vmem>>, vector<8x256xf32>,
    return
  }
  func.func @transform_0(%arg0: i32) -> (i32, i32) {
    %c0_i32 = arith.constant 0 : i32
    %c0_i32_0 = arith.constant 0 : i32
    return %arg0, %c0_i32 : i32, i32
  }
  func.func @transform_1(%arg0: i32) -> (i32, i32) {
    %c0_i32 = arith.constant 0 : i32
    %c0_i32_0 = arith.constant 0 : i32
    return %arg0, %c0_i32 : i32, i32
  }
}

</mosaic_0001>

<llo_original>
// kernel: tpu_custom_call.1
$region0: #{tpu_custom_call.1}
  #allocation0 [shape = 'u32[]', space=smem, size = 0x4, offset = 0x4, fixed_abs, tag = 'smem constant byte address 0x4 - core index']
  #allocation1 [shape = 'u32[72,128]{1,0:T(1,128)}', space=vmem, size = 0x9000, scoped, tag = 'internal scratch']
  %s0 = inlined_call_operand.hbm [shape: f32[8,256], index: 0, kind: input, shape index: {}]
  %s1 = inlined_call_operand.hbm [shape: f32[8,256], index: 1, kind: output, shape index: {}]
  %s2 = sld [smem:[#allocation0]]
  $region18: #{tpu_custom_call.1} parent=0
    _
  %s4 = ssub.s32 1, %s2
  %s5 = scalar_select 0, %s4, %s2
  $region1: #{tpu_custom_call.1} parent=0
    #allocation2 [shape = 'u8[8192]{0}', space=vmem, size = 0x2000, scoped, tag = 'input window, operand 0, single buffered']
    #allocation3 [shape = 's32[1]{0}', space=sflag, size = 0x4, scoped, tag = 'scoped memory for tpu_custom_call.1']
    #allocation4 [shape = 's32[1]{0}', space=sflag, size = 0x4, scoped, tag = 'scoped memory for tpu_custom_call.1']
    #allocation5 [shape = 'u8[8192]{0}', space=vmem, size = 0x2000, scoped, tag = 'output window, operand 0, single buffered']
    %6 = vsyncpa [#allocation3], 0
    %7 = vsyncpa [#allocation4], 0
    // Predicated region
    $region2: #{tpu_custom_call.1} parent=1 // pred_check
      _
    $region3: #{tpu_custom_call.1} parent=1 // pred_check_branch
      %9 = sbr.rel (0) target = $region5
    $region4: #{tpu_custom_call.1} parent=1 // pred_region
      %11 = vsyncadd [#allocation3], 0
      %s13 = sshll.u32 %s0, 4
      %s14 = int_to_ptr.hbm [resolvable:$true] %s13
      %s15 = sshll.u32 [#allocation2], 4
      %s16 = int_to_ptr.vmem [resolvable:$true] %s15
      %18 = dma.hbm_to_vmem [thread:$0]  %s14, 256, %s16, [#allocation3]
    $region5: #{tpu_custom_call.1} parent=1 // pred_fallthru
      _
    // Predicated region
    $region6: #{tpu_custom_call.1} parent=1 // pred_check
      _
    $region7: #{tpu_custom_call.1} parent=1 // pred_check_branch
      %20 = sbr.rel (0) target = $region9
    $region8: #{tpu_custom_call.1} parent=1 // pred_region
      %22 = dma.done [#allocation3], 256
    $region9: #{tpu_custom_call.1} parent=1 // pred_fallthru
      _
    %v23 = vld [vmem:[#allocation2] sm:$0xff]
    %v24 = vld [vmem:[#allocation2 + $0x8] sm:$0xff]
    %25 = vrot.lane.b32.xlu0 %v23, 44
    %v26 = vpop.permute.xlu0 %25
    %27 = vrot.lane.b32.xlu0 %v24, 44
    %v28 = vpop.permute.xlu0 %27
    %v29 = vlaneseq
    %v30 = vand.u32 %v29, 127
    %vm31 = vcmp.lt.s32.totalorder %v30, 44
    %v32 = vsel %vm31, %v26, %v28
    %v33 = vsel %vm31, %v28, %v26
    %34 = vst [vmem:[#allocation5] sm:$0xff] %v33
    %35 = vst [vmem:[#allocation5 + $0x8] sm:$0xff] %v32
    // Predicated region
    $region10: #{tpu_custom_call.1} parent=1 // pred_check
      _
    $region11: #{tpu_custom_call.1} parent=1 // pred_check_branch
      %37 = sbr.rel (0) target = $region13
    $region12: #{tpu_custom_call.1} parent=1 // pred_region
      %39 = vsyncadd [#allocation4], 0
      %s41 = sshll.u32 [#allocation5], 4
      %s42 = int_to_ptr.vmem [resolvable:$true] %s41
      %s43 = sshll.u32 %s1, 4
      %s44 = int_to_ptr.hbm [resolvable:$true] %s43
      %46 = dma.vmem_to_hbm [thread:$0]  %s42, 256, %s44, [#allocation4]
    $region13: #{tpu_custom_call.1} parent=1 // pred_fallthru
      _
    // Predicated region
    $region14: #{tpu_custom_call.1} parent=1 // pred_check
      _
    $region15: #{tpu_custom_call.1} parent=1 // pred_check_branch
      %48 = sbr.rel (0) target = $region17
    $region16: #{tpu_custom_call.1} parent=1 // pred_region
      %50 = dma.done [#allocation4], 256
    $region17: #{tpu_custom_call.1} parent=1 // pred_fallthru
      _
    %51 = vsyncpa [#allocation3], 1
    %52 = vsyncpa [#allocation4], 1

</llo_original>
